<compile_context>
chip_gen: v7x
topology: tpu7x:2x2x1
jax: 0.10.0
libtpu: 0.0.40
codegen_flags: <defaults>
</compile_context>

<pallas_src>
import functools

import jax
import jax.numpy as jnp
from jax import lax
from jax.experimental import pallas as pl
from jax.experimental.pallas import tpu as pltpu

H1 = 128          # first hidden width (already lane-dense)
H2 = 64           # second hidden width ("hidden_features" in the torch module)
H2_PAD = 128      # h2 padded to a full 128-lane vreg width
OUT_LANES = 128   # single lane-dense output slab width
PROBS_OFF = 64    # probs live at lanes [PROBS_OFF : PROBS_OFF + num_actions]


def _round_up(n, m):
    return (n + m - 1) // m * m


def ppo_fused_kernel(x_ref, w1_ref, b1_ref, w2_ref, b2_ref, wh_ref, bh_ref,
                     out_ref, *, num_actions):
    x = x_ref[...]                      # (TM, obs)   f32
    w1 = w1_ref[...]                    # (obs, 128)  f32
    tm = x.shape[0]
    obs = x.shape[1]

    # ---- Layer 1: K = obs_features (tiny, e.g. 2) -> VPU FMAs, not the MXU.
    h1 = jnp.broadcast_to(b1_ref[...], (tm, H1))
    for k in range(obs):                # static, unrolled
        h1 = h1 + x[:, k:k + 1] * w1[k:k + 1, :]
    h1 = jnp.maximum(h1, 0.0)

    # ---- Layer 2 (MXU): (TM,128) @ (128,128); cols >= 64 are exactly zero
    #      because w2/b2 are zero-padded there.
    h2 = jnp.dot(h1, w2_ref[...], preferred_element_type=jnp.float32) + b2_ref[...]
    h2 = jnp.maximum(h2, 0.0)

    # ---- Fused actor+critic head (MXU): one (TM,128) result.
    #      lanes [0:A] = logits, lane A = value,
    #      lanes [PROBS_OFF:PROBS_OFF+A] = duplicated logits (for in-place softmax),
    #      everything else exactly 0.
    head = jnp.dot(h2, wh_ref[...], preferred_element_type=jnp.float32) + bh_ref[...]

    # ---- Softmax masked to the duplicated-logits lanes only (padded lanes
    #      must NOT contribute to max/sum).
    col = lax.broadcasted_iota(jnp.int32, head.shape, 1)
    probs_mask = jnp.logical_and(col >= PROBS_OFF, col < PROBS_OFF + num_actions)
    neg_inf = jnp.float32(-jnp.inf)
    m = jnp.max(jnp.where(probs_mask, head, neg_inf), axis=-1, keepdims=True)
    e = jnp.where(probs_mask, jnp.exp(head - m), 0.0)
    denom = jnp.sum(e, axis=-1, keepdims=True)
    probs = e * pl.reciprocal(denom, approx=False)   # exact: keeps 1e-5 parity

    # ---- Single lane-dense, unmasked 128-lane store.
    logits_value = jnp.where(col <= num_actions, head, 0.0)
    out_ref[...] = logits_value + probs


def pack_params(params, num_actions):
    """Pack / zero-pad torch-layout params into the lane-dense kernel layout."""
    A = num_actions
    w1 = params["w1"]                                   # (obs, 128)
    b1 = params["b1"].reshape(1, H1)

    w2 = jnp.zeros((H1, H2_PAD), jnp.float32).at[:, :H2].set(params["w2"])
    b2 = jnp.zeros((1, H2_PAD), jnp.float32).at[:, :H2].set(
        params["b2"].reshape(1, H2))

    wh = jnp.zeros((H2_PAD, OUT_LANES), jnp.float32)
    wh = wh.at[:H2, :A].set(params["wa"])                       # logits
    wh = wh.at[:H2, A:A + 1].set(params["wc"])                  # value
    wh = wh.at[:H2, PROBS_OFF:PROBS_OFF + A].set(params["wa"])  # logits (dup for softmax)
    bh = jnp.zeros((1, OUT_LANES), jnp.float32)
    bh = bh.at[:, :A].set(params["ba"].reshape(1, A))
    bh = bh.at[:, A:A + 1].set(params["bc"].reshape(1, 1))
    bh = bh.at[:, PROBS_OFF:PROBS_OFF + A].set(params["ba"].reshape(1, A))

    return w1, b1, w2, b2, wh, bh


def ppo_forward(x, params, num_actions, *, block_rows=512):
    """Fused PPO forward pass. Returns (logits, probs, value)."""
    B, obs = x.shape
    A = num_actions
    assert A + 1 <= PROBS_OFF and PROBS_OFF + A <= OUT_LANES

    w1, b1, w2, b2, wh, bh = pack_params(params, A)

    # Batch tile: multiple of 8 (f32 sublane); large enough to amortize the
    # ~0.35us per-grid-step overhead, tiny vs VMEM on v5e/v6e (128 MiB) and
    # v7x (64 MiB) -- see budget derivation in the header comment.
    TM = min(block_rows, _round_up(B, 8))
    Bp = _round_up(B, TM)
    if Bp != B:
        x = jnp.pad(x, ((0, Bp - B), (0, 0)))
    grid = (Bp // TM,)

    kernel = functools.partial(ppo_fused_kernel, num_actions=A)
    resident = lambda i: (0, 0)   # weights/biases: block index never changes -> stay in VMEM

    out = pl.pallas_call(
        kernel,
        out_shape=jax.ShapeDtypeStruct((Bp, OUT_LANES), jnp.float32),
        grid_spec=pltpu.PrefetchScalarGridSpec(
            num_scalar_prefetch=0,
            grid=grid,
            in_specs=[
                pl.BlockSpec((TM, obs), lambda i: (i, 0)),      # x, tiled over batch
                pl.BlockSpec((obs, H1), resident),              # w1
                pl.BlockSpec((1, H1), resident),                # b1
                pl.BlockSpec((H1, H2_PAD), resident),           # w2 (padded)
                pl.BlockSpec((1, H2_PAD), resident),            # b2 (padded)
                pl.BlockSpec((H2_PAD, OUT_LANES), resident),    # fused head W
                pl.BlockSpec((1, OUT_LANES), resident),         # fused head b
            ],
            out_specs=pl.BlockSpec((TM, OUT_LANES), lambda i: (i, 0)),
        ),
        compiler_params=pltpu.CompilerParams(
            dimension_semantics=("parallel",),   # 2x on v7x's two TCs; no-op on v5e/v6e
        ),
    )(x, w1, b1, w2, b2, wh, bh)

    logits = out[:B, :A]
    value = out[:B, A:A + 1]
    probs = out[:B, PROBS_OFF:PROBS_OFF + A]
    return logits, probs, value


def init_params(key, obs_features, num_actions, hidden_features=64):
    """PyTorch-Linear-style init: U(-1/sqrt(fan_in), 1/sqrt(fan_in)).

    Weights stored transposed relative to torch ((in, out)) so x @ W applies.
    """
    def linear(key, fan_in, fan_out):
        kw, kb = jax.random.split(key)
        bound = 1.0 / jnp.sqrt(float(fan_in))
        w = jax.random.uniform(kw, (fan_in, fan_out), jnp.float32, -bound, bound)
        b = jax.random.uniform(kb, (1, fan_out), jnp.float32, -bound, bound)
        return w, b

    k1, k2, k3, k4 = jax.random.split(key, 4)
    w1, b1 = linear(k1, obs_features, H1)
    w2, b2 = linear(k2, H1, hidden_features)
    wa, ba = linear(k3, hidden_features, num_actions)
    wc, bc = linear(k4, hidden_features, 1)
    return {"w1": w1, "b1": b1, "w2": w2, "b2": b2,
            "wa": wa, "ba": ba, "wc": wc, "bc": bc}


def ppo_forward_ref(x, p):
    """Pure-JAX reference of the same forward pass."""
    h1 = jnp.maximum(x @ p["w1"] + p["b1"], 0.0)
    h2 = jnp.maximum(h1 @ p["w2"] + p["b2"], 0.0)
    logits = h2 @ p["wa"] + p["ba"]
    probs = jax.nn.softmax(logits, axis=-1)
    value = h2 @ p["wc"] + p["bc"]
    return logits, probs, value


if __name__ == "__main__":
    # CartPole-no-velocity: (cart position, pole angle) -> 2 obs features,
    # 2 discrete actions. Small batch.
    # TODO(synk): the torch module returns a Categorical distribution object;
    # here the distribution is returned as its (logits, probs) tensors.
    batch = 8
    obs_features = 2
    num_actions = 2

    key = jax.random.PRNGKey(0)
    k_obs, k_params = jax.random.split(key)

    obs = jax.random.normal(k_obs, (batch, obs_features), dtype=jnp.float32)
    params = init_params(k_params, obs_features, num_actions)

    logits, probs, value = ppo_forward(obs, params, num_actions)
    jax.block_until_ready((logits, probs, value))

    ref_logits, ref_probs, ref_value = ppo_forward_ref(obs, params)
    assert jnp.allclose(logits, ref_logits, atol=1e-5, rtol=1e-5)
    assert jnp.allclose(probs, ref_probs, atol=1e-5, rtol=1e-5)
    assert jnp.allclose(value, ref_value, atol=1e-5, rtol=1e-5)

    print("KERNEL_OK")
</pallas_src>

<mosaic_0001>
module attributes {stable_mosaic.version = 11 : i64} {
  func.func @ppo_fused_kernel(%arg0: i32, %arg1: memref<8x2xf32, #tpu.memory_space<vmem>>, %arg2: memref<2x128xf32, #tpu.memory_space<vmem>>, %arg3: memref<1x128xf32, #tpu.memory_space<vmem>>, %arg4: memref<128x128xf32, #tpu.memory_space<vmem>>, %arg5: memref<1x128xf32, #tpu.memory_space<vmem>>, %arg6: memref<128x128xf32, #tpu.memory_space<vmem>>, %arg7: memref<1x128xf32, #tpu.memory_space<vmem>>, %arg8: memref<8x128xf32, #tpu.memory_space<vmem>>) attributes {dimension_semantics = [#tpu.dimension_semantics<parallel>], iteration_bounds = array<i64: 1>, scalar_prefetch = 0 : i64, scratch_operands = 0 : i64, tpu.core_type = #tpu.core_type<tc>, window_params = [{transform_indices = @transform_0, window_bounds = array<i64: 8, 2>}, {pipeline_mode = #tpu.pipeline_mode<synchronous>, transform_indices = @transform_1, window_bounds = array<i64: 2, 128>}, {pipeline_mode = #tpu.pipeline_mode<synchronous>, transform_indices = @transform_2, window_bounds = array<i64: 1, 128>}, {pipeline_mode = #tpu.pipeline_mode<synchronous>, transform_indices = @transform_3, window_bounds = array<i64: 128, 128>}, {pipeline_mode = #tpu.pipeline_mode<synchronous>, transform_indices = @transform_4, window_bounds = array<i64: 1, 128>}, {pipeline_mode = #tpu.pipeline_mode<synchronous>, transform_indices = @transform_5, window_bounds = array<i64: 128, 128>}, {pipeline_mode = #tpu.pipeline_mode<synchronous>, transform_indices = @transform_6, window_bounds = array<i64: 1, 128>}, {transform_indices = @transform_7, window_bounds = array<i64: 8, 128>}]} {
    %c0 = arith.constant 0 : index
    %c0_0 = arith.constant 0 : index
    %0 = vector.load %arg1[%c0, %c0_0] : memref<8x2xf32, #tpu.memory_space<vmem>>, vector<8x2xf32>
    %c0_1 = arith.constant 0 : index
    %c0_2 = arith.constant 0 : index
    %1 = vector.load %arg2[%c0_1, %c0_2] : memref<2x128xf32, #tpu.memory_space<vmem>>, vector<2x128xf32>
    %c0_3 = arith.constant 0 : index
    %c0_4 = arith.constant 0 : index
    %2 = vector.load %arg3[%c0_3, %c0_4] : memref<1x128xf32, #tpu.memory_space<vmem>>, vector<1x128xf32>
    %3 = vector.shape_cast %2 : vector<1x128xf32> to vector<1x128xf32>
    %4 = vector.broadcast %3 : vector<1x128xf32> to vector<8x128xf32>
    %5 = vector.extract_strided_slice %0 {offsets = [0, 0], sizes = [8, 1], strides = [1, 1]} : vector<8x2xf32> to vector<8x1xf32>
    %6 = vector.extract_strided_slice %1 {offsets = [0, 0], sizes = [1, 128], strides = [1, 1]} : vector<2x128xf32> to vector<1x128xf32>
    %7 = vector.broadcast %5 : vector<8x1xf32> to vector<8x128xf32>
    %8 = vector.broadcast %6 : vector<1x128xf32> to vector<8x128xf32>
    %9 = arith.mulf %7, %8 : vector<8x128xf32>
    %10 = arith.addf %4, %9 : vector<8x128xf32>
    %11 = vector.extract_strided_slice %0 {offsets = [0, 1], sizes = [8, 1], strides = [1, 1]} : vector<8x2xf32> to vector<8x1xf32>
    %12 = vector.extract_strided_slice %1 {offsets = [1, 0], sizes = [1, 128], strides = [1, 1]} : vector<2x128xf32> to vector<1x128xf32>
    %13 = vector.broadcast %11 : vector<8x1xf32> to vector<8x128xf32>
    %14 = vector.broadcast %12 : vector<1x128xf32> to vector<8x128xf32>
    %15 = arith.mulf %13, %14 : vector<8x128xf32>
    %16 = arith.addf %10, %15 : vector<8x128xf32>
    %cst = arith.constant 0.000000e+00 : f32
    %17 = vector.broadcast %cst : f32 to vector<8x128xf32>
    %18 = arith.maximumf %16, %17 : vector<8x128xf32>
    %c0_5 = arith.constant 0 : index
    %c0_6 = arith.constant 0 : index
    %19 = vector.load %arg4[%c0_5, %c0_6] : memref<128x128xf32, #tpu.memory_space<vmem>>, vector<128x128xf32>
    %cst_7 = arith.constant dense<0.000000e+00> : vector<8x128xf32>
    %20 = tpu.matmul %18, %19, %cst_7 {dimension_numbers = #tpu.dot_dimension_numbers<[1], [0], [0], [1], [0, 0, 1, 1], [], []>} : vector<8x128xf32>, vector<128x128xf32>, vector<8x128xf32> -> vector<8x128xf32>
    %c0_8 = arith.constant 0 : index
    %c0_9 = arith.constant 0 : index
    %21 = vector.load %arg5[%c0_8, %c0_9] : memref<1x128xf32, #tpu.memory_space<vmem>>, vector<1x128xf32>
    %22 = vector.broadcast %21 : vector<1x128xf32> to vector<8x128xf32>
    %23 = arith.addf %20, %22 : vector<8x128xf32>
    %cst_10 = arith.constant 0.000000e+00 : f32
    %24 = vector.broadcast %cst_10 : f32 to vector<8x128xf32>
    %25 = arith.maximumf %23, %24 : vector<8x128xf32>
    %c0_11 = arith.constant 0 : index
    %c0_12 = arith.constant 0 : index
    %26 = vector.load %arg6[%c0_11, %c0_12] : memref<128x128xf32, #tpu.memory_space<vmem>>, vector<128x128xf32>
    %cst_13 = arith.constant dense<0.000000e+00> : vector<8x128xf32>
    %27 = tpu.matmul %25, %26, %cst_13 {dimension_numbers = #tpu.dot_dimension_numbers<[1], [0], [0], [1], [0, 0, 1, 1], [], []>} : vector<8x128xf32>, vector<128x128xf32>, vector<8x128xf32> -> vector<8x128xf32>
    %c0_14 = arith.constant 0 : index
    %c0_15 = arith.constant 0 : index
    %28 = vector.load %arg7[%c0_14, %c0_15] : memref<1x128xf32, #tpu.memory_space<vmem>>, vector<1x128xf32>
    %29 = vector.broadcast %28 : vector<1x128xf32> to vector<8x128xf32>
    %30 = arith.addf %27, %29 : vector<8x128xf32>
    %31 = tpu.iota {dimensions = array<i32: 1>} : vector<8x128xi32>
    %c64_i32 = arith.constant 64 : i32
    %32 = vector.broadcast %c64_i32 : i32 to vector<8x128xi32>
    %33 = arith.cmpi sge, %31, %32 : vector<8x128xi32>
    %c66_i32 = arith.constant 66 : i32
    %34 = vector.broadcast %c66_i32 : i32 to vector<8x128xi32>
    %35 = arith.cmpi slt, %31, %34 : vector<8x128xi32>
    %36 = arith.andi %33, %35 : vector<8x128xi1>
    %cst_16 = arith.constant 0xFF800000 : f32
    %37 = vector.broadcast %cst_16 : f32 to vector<8x128xf32>
    %38 = arith.select %36, %30, %37 : vector<8x128xi1>, vector<8x128xf32>
    %cst_17 = arith.constant dense<0xFF800000> : vector<8xf32>
    %39 = vector.multi_reduction <maximumf>, %38, %cst_17 [1] : vector<8x128xf32> to vector<8xf32>
    %40 = vector.shape_cast %39 : vector<8xf32> to vector<8x1xf32>
    %41 = vector.broadcast %40 : vector<8x1xf32> to vector<8x128xf32>
    %42 = arith.subf %30, %41 : vector<8x128xf32>
    %43 = math.exp %42 : vector<8x128xf32>
    %cst_18 = arith.constant 0.000000e+00 : f32
    %44 = vector.broadcast %cst_18 : f32 to vector<8x128xf32>
    %45 = arith.select %36, %43, %44 : vector<8x128xi1>, vector<8x128xf32>
    %cst_19 = arith.constant dense<0.000000e+00> : vector<8xf32>
    %46 = vector.multi_reduction <add>, %45, %cst_19 [1] : vector<8x128xf32> to vector<8xf32>
    %47 = vector.shape_cast %46 : vector<8xf32> to vector<8x1xf32>
    %48 = tpu.reciprocal %47 : vector<8x1xf32> -> vector<8x1xf32>
    %49 = vector.broadcast %48 : vector<8x1xf32> to vector<8x128xf32>
    %50 = arith.mulf %45, %49 : vector<8x128xf32>
    %c2_i32 = arith.constant 2 : i32
    %51 = vector.broadcast %c2_i32 : i32 to vector<8x128xi32>
    %52 = arith.cmpi sle, %31, %51 : vector<8x128xi32>
    %cst_20 = arith.constant 0.000000e+00 : f32
    %53 = vector.broadcast %cst_20 : f32 to vector<8x128xf32>
    %54 = arith.select %52, %30, %53 : vector<8x128xi1>, vector<8x128xf32>
    %55 = arith.addf %54, %50 : vector<8x128xf32>
    %c0_21 = arith.constant 0 : index
    %c0_22 = arith.constant 0 : index
    %56 = vector.load %arg8[%c0_21, %c0_22] : memref<8x128xf32, #tpu.memory_space<vmem>>, vector<8x128xf32>
    tpu.vector_store %arg8[%c0_21, %c0_22], %55 {strides = array<i32>} : memref<8x128xf32, #tpu.memory_space<vmem>>, vector<8x128xf32>,
    return
  }
  func.func @transform_0(%arg0: i32) -> (i32, i32) {
    %c0_i32 = arith.constant 0 : i32
    %c0_i32_0 = arith.constant 0 : i32
    return %arg0, %c0_i32 : i32, i32
  }
  func.func @transform_1(%arg0: i32) -> (i32, i32) {
    %c0_i32 = arith.constant 0 : i32
    %c0_i32_0 = arith.constant 0 : i32
    %c0_i32_1 = arith.constant 0 : i32
    return %c0_i32, %c0_i32_0 : i32, i32
  }
  func.func @transform_2(%arg0: i32) -> (i32, i32) {
    %c0_i32 = arith.constant 0 : i32
    %c0_i32_0 = arith.constant 0 : i32
    %c0_i32_1 = arith.constant 0 : i32
    return %c0_i32, %c0_i32_0 : i32, i32
  }
  func.func @transform_3(%arg0: i32) -> (i32, i32) {
    %c0_i32 = arith.constant 0 : i32
    %c0_i32_0 = arith.constant 0 : i32
    %c0_i32_1 = arith.constant 0 : i32
    return %c0_i32, %c0_i32_0 : i32, i32
  }
  func.func @transform_4(%arg0: i32) -> (i32, i32) {
    %c0_i32 = arith.constant 0 : i32
    %c0_i32_0 = arith.constant 0 : i32
    %c0_i32_1 = arith.constant 0 : i32
    return %c0_i32, %c0_i32_0 : i32, i32
  }
  func.func @transform_5(%arg0: i32) -> (i32, i32) {
    %c0_i32 = arith.constant 0 : i32
    %c0_i32_0 = arith.constant 0 : i32
    %c0_i32_1 = arith.constant 0 : i32
    return %c0_i32, %c0_i32_0 : i32, i32
  }
  func.func @transform_6(%arg0: i32) -> (i32, i32) {
    %c0_i32 = arith.constant 0 : i32
    %c0_i32_0 = arith.constant 0 : i32
    %c0_i32_1 = arith.constant 0 : i32
    return %c0_i32, %c0_i32_0 : i32, i32
  }
  func.func @transform_7(%arg0: i32) -> (i32, i32) {
    %c0_i32 = arith.constant 0 : i32
    %c0_i32_0 = arith.constant 0 : i32
    return %arg0, %c0_i32 : i32, i32
  }
}

</mosaic_0001>

<llo_original>
// kernel: tpu_custom_call.1
$region0: #{tpu_custom_call.1}
  #allocation0 [shape = 'u32[]', space=smem, size = 0x4, offset = 0x4, fixed_abs, tag = 'smem constant byte address 0x4 - core index']
  #allocation1 [shape = 'u32[144,128]{1,0:T(1,128)}', space=vmem, size = 0x12000, scoped, tag = 'internal scratch']
  %s0 = inlined_call_operand.vmem [shape: f32[8,2], index: 0, kind: input, shape index: {}]
  %s1 = inlined_call_operand.vmem [shape: f32[2,128], index: 1, kind: input, shape index: {}]
  %s2 = inlined_call_operand.vmem [shape: f32[1,128], index: 2, kind: input, shape index: {}]
  %s3 = inlined_call_operand.hbm [shape: f32[128,128], index: 3, kind: input, shape index: {}]
  %s4 = inlined_call_operand.vmem [shape: f32[1,128], index: 4, kind: input, shape index: {}]
  %s5 = inlined_call_operand.hbm [shape: f32[128,128], index: 5, kind: input, shape index: {}]
  %s6 = inlined_call_operand.vmem [shape: f32[1,128], index: 6, kind: input, shape index: {}]
  %s7 = inlined_call_operand.hbm [shape: f32[8,128], index: 7, kind: output, shape index: {}]
  %s8 = sld [smem:[#allocation0]]
  $region46: #{tpu_custom_call.1} parent=0
    _
  %s10 = ssub.s32 1, %s8
  %s11 = scalar_select 0, %s10, %s8
  $region1: #{tpu_custom_call.1} parent=0
    #allocation2 [shape = 'u8[65536]{0}', space=vmem, size = 0x10000, scoped, tag = 'input window, operand 3, single buffered']
    #allocation3 [shape = 's32[1]{0}', space=sflag, size = 0x4, scoped, tag = 'scoped memory for tpu_custom_call.1']
    #allocation4 [shape = 's32[1]{0}', space=sflag, size = 0x4, scoped, tag = 'scoped memory for tpu_custom_call.1']
    #allocation5 [shape = 'u8[65536]{0}', space=vmem, size = 0x10000, scoped, tag = 'input window, operand 5, single buffered']
    #allocation6 [shape = 's32[1]{0}', space=sflag, size = 0x4, scoped, tag = 'scoped memory for tpu_custom_call.1']
    #allocation7 [shape = 'u8[4096]{0}', space=vmem, size = 0x1000, scoped, tag = 'output window, operand 0, single buffered']
    %12 = vsyncpa [#allocation3], 0
    %13 = vsyncpa [#allocation6], 0
    %14 = vsyncpa [#allocation4], 0
    // Predicated region
    $region2: #{tpu_custom_call.1} parent=1 // pred_check
      _
    $region3: #{tpu_custom_call.1} parent=1 // pred_check_branch
      %16 = sbr.rel (0) target = $region5
    $region4: #{tpu_custom_call.1} parent=1 // pred_region
      _
    $region5: #{tpu_custom_call.1} parent=1 // pred_fallthru
      _
    // Predicated region
    $region6: #{tpu_custom_call.1} parent=1 // pred_check
      _
    $region7: #{tpu_custom_call.1} parent=1 // pred_check_branch
      %18 = sbr.rel (0) target = $region9
    $region8: #{tpu_custom_call.1} parent=1 // pred_region
      _
    $region9: #{tpu_custom_call.1} parent=1 // pred_fallthru
      _
    // Predicated region
    $region10: #{tpu_custom_call.1} parent=1 // pred_check
      _
    $region11: #{tpu_custom_call.1} parent=1 // pred_check_branch
      %20 = sbr.rel (0) target = $region13
    $region12: #{tpu_custom_call.1} parent=1 // pred_region
      _
    $region13: #{tpu_custom_call.1} parent=1 // pred_fallthru
      _
    // Predicated region
    $region14: #{tpu_custom_call.1} parent=1 // pred_check
      _
    $region15: #{tpu_custom_call.1} parent=1 // pred_check_branch
      %22 = sbr.rel (0) target = $region17
    $region16: #{tpu_custom_call.1} parent=1 // pred_region
      %s24 = ssub.s32 2048, 2048
      %25 = vsyncadd [#allocation3], %s24
      %s26 = sshll.u32 [#allocation2], 4
      %s27 = int_to_ptr.vmem [resolvable:$true] %s26
      %32 = dma.hbm_to_vmem [thread:$0]  %s3, 2048, %s27, [#allocation3], 128, 128, 8
    $region17: #{tpu_custom_call.1} parent=1 // pred_fallthru
      _
    // Predicated region
    $region18: #{tpu_custom_call.1} parent=1 // pred_check
      _
    $region19: #{tpu_custom_call.1} parent=1 // pred_check_branch
      %34 = sbr.rel (0) target = $region21
    $region20: #{tpu_custom_call.1} parent=1 // pred_region
      _
    $region21: #{tpu_custom_call.1} parent=1 // pred_fallthru
      _
    // Predicated region
    $region22: #{tpu_custom_call.1} parent=1 // pred_check
      _
    $region23: #{tpu_custom_call.1} parent=1 // pred_check_branch
      %36 = sbr.rel (0) target = $region25
    $region24: #{tpu_custom_call.1} parent=1 // pred_region
      %s38 = ssub.s32 2048, 2048
      %39 = vsyncadd [#allocation6], %s38
      %s40 = sshll.u32 [#allocation5], 4
      %s41 = int_to_ptr.vmem [resolvable:$true] %s40
      %46 = dma.hbm_to_vmem [thread:$0]  %s5, 2048, %s41, [#allocation6], 128, 128, 8
    $region25: #{tpu_custom_call.1} parent=1 // pred_fallthru
      _
    // Predicated region
    $region26: #{tpu_custom_call.1} parent=1 // pred_check
      _
    $region27: #{tpu_custom_call.1} parent=1 // pred_check_branch
      %48 = sbr.rel (0) target = $region29
    $region28: #{tpu_custom_call.1} parent=1 // pred_region
      _
    $region29: #{tpu_custom_call.1} parent=1 // pred_fallthru
      _
    // Predicated region
    $region30: #{tpu_custom_call.1} parent=1 // pred_check
      _
    $region31: #{tpu_custom_call.1} parent=1 // pred_check_branch
      %50 = sbr.rel (0) target = $region33
    $region32: #{tpu_custom_call.1} parent=1 // pred_region
      %51 = dma.done [#allocation3], 2048
    $region33: #{tpu_custom_call.1} parent=1 // pred_fallthru
      _
    // Predicated region
    $region34: #{tpu_custom_call.1} parent=1 // pred_check
      _
    $region35: #{tpu_custom_call.1} parent=1 // pred_check_branch
      %53 = sbr.rel (0) target = $region37
    $region36: #{tpu_custom_call.1} parent=1 // pred_region
      %54 = dma.done [#allocation6], 2048
    $region37: #{tpu_custom_call.1} parent=1 // pred_fallthru
      _
    %v55 = vld [vmem:[%s0] sm:$0xff]
    %v56 = vld [vmem:[%s1] sm:$0x3]
    %v57 = vld [vmem:[%s2] sm:$0x1]
    %v59 = vlaneseq
    %v60 = vshrl.u32 %v59, 7
    %v61 = vsub.s32 0, %v60
    %v62 = vrot.slane %v57, %v61
    %65 = vset.pattern.permute.xlu0 0
    %66 = vperm.xlu0 %65, %v55
    %v67 = vpop.permute.xlu0 %66
    %v69 = vlaneseq
    %v70 = vshrl.u32 %v69, 7
    %v71 = vsub.s32 0, %v70
    %v72 = vrot.slane %v56, %v71
    %v73 = vmul.f32 %v67, %v72
    %v74 = vadd.f32 %v62, %v73
    %75 = vset.pattern.permute.xlu0 1
    %76 = vperm.xlu0 %75, %v55
    %v77 = vpop.permute.xlu0 %76
    %v79 = vlaneseq
    %v80 = vshrl.u32 %v79, 7
    %v81 = vsub.s32 1, %v80
    %v82 = vrot.slane %v56, %v81
    %v83 = vmul.f32 %v77, %v82
    %v84 = vadd.f32 %v74, %v83
    %v85 = vmax.f32 %v84, 0.0
    %v86 = vld [vmem:[#allocation2] sm:$0xff]
    %v87 = vld [vmem:[#allocation2 + $0x8] sm:$0xff]
    %v88 = vld [vmem:[#allocation2 + $0x10] sm:$0xff]
    %v89 = vld [vmem:[#allocation2 + $0x18] sm:$0xff]
    %v90 = vld [vmem:[#allocation2 + $0x20] sm:$0xff]
    %v91 = vld [vmem:[#allocation2 + $0x28] sm:$0xff]
    %v92 = vld [vmem:[#allocation2 + $0x30] sm:$0xff]
    %v93 = vld [vmem:[#allocation2 + $0x38] sm:$0xff]
    %v94 = vld [vmem:[#allocation2 + $0x40] sm:$0xff]
    %v95 = vld [vmem:[#allocation2 + $0x48] sm:$0xff]
    %v96 = vld [vmem:[#allocation2 + $0x50] sm:$0xff]
    %v97 = vld [vmem:[#allocation2 + $0x58] sm:$0xff]
    %v98 = vld [vmem:[#allocation2 + $0x60] sm:$0xff]
    %v99 = vld [vmem:[#allocation2 + $0x68] sm:$0xff]
    %v100 = vld [vmem:[#allocation2 + $0x70] sm:$0xff]
    %v101 = vld [vmem:[#allocation2 + $0x78] sm:$0xff]
    %v102 = vld [vmem:[%s4] sm:$0x1]
    %v104 = vlaneseq
    %v105 = vshrl.u32 %v104, 7
    %v106 = vsub.s32 0, %v105
    %v107 = vrot.slane %v102, %v106
    %109 = vmatprep.subr.mxu0 0.0
    %110 = vmatpush1.msra.mxu0 %v86
    %111 = vmatprep.subr.mxu0 0.0
    %112 = vmatpush1.msra.mxu0 %v87
    %113 = vmatprep.subr.mxu0 0.0
    %114 = vmatpush1.msra.mxu0 %v88
    %115 = vmatprep.subr.mxu0 0.0
    %116 = vmatpush1.msra.mxu0 %v89
    %117 = vmatprep.subr.mxu0 0.0
    %118 = vmatpush1.msra.mxu0 %v90
    %119 = vmatprep.subr.mxu0 0.0
    %120 = vmatpush1.msra.mxu0 %v91
    %121 = vmatprep.subr.mxu0 0.0
    %122 = vmatpush1.msra.mxu0 %v92
    %123 = vmatprep.subr.mxu0 0.0
    %124 = vmatpush1.msra.mxu0 %v93
    %125 = vmatprep.subr.mxu0 0.0
    %126 = vmatpush1.msra.mxu0 %v94
    %127 = vmatprep.subr.mxu0 0.0
    %128 = vmatpush1.msra.mxu0 %v95
    %129 = vmatprep.subr.mxu0 0.0
    %130 = vmatpush1.msra.mxu0 %v96
    %131 = vmatprep.subr.mxu0 0.0
    %132 = vmatpush1.msra.mxu0 %v97
    %133 = vmatprep.subr.mxu0 0.0
    %134 = vmatpush1.msra.mxu0 %v98
    %135 = vmatprep.subr.mxu0 0.0
    %136 = vmatpush1.msra.mxu0 %v99
    %137 = vmatprep.subr.mxu0 0.0
    %138 = vmatpush1.msra.mxu0 %v100
    %139 = vmatprep.subr.mxu0 0.0
    %140 = vmatpush1.msra.mxu0 %v101
    %141 = vmatprep.subr.mxu0 0.0
    %142 = vmatpush1.msra.mxu0 0.0
    %143 = vmatprep.subr.mxu0 0.0
    %144 = vmatpush1.msra.mxu0 0.0
    %145 = vmatprep.subr.mxu0 0.0
    %146 = vmatpush1.msra.mxu0 0.0
    %147 = vmatprep.subr.mxu0 0.0
    %148 = vmatpush1.msra.mxu0 0.0
    %149 = vmatprep.subr.mxu0 0.0
    %150 = vmatpush1.msra.mxu0 0.0
    %151 = vmatprep.subr.mxu0 0.0
    %152 = vmatpush1.msra.mxu0 0.0
    %153 = vmatprep.subr.mxu0 0.0
    %154 = vmatpush1.msra.mxu0 0.0
    %155 = vmatprep.subr.mxu0 0.0
    %156 = vmatpush1.msra.mxu0 0.0
    %157 = vmatprep.subr.mxu0 0.0
    %158 = vmatpush1.msra.mxu0 0.0
    %159 = vmatprep.subr.mxu0 0.0
    %160 = vmatpush1.msra.mxu0 0.0
    %161 = vmatprep.subr.mxu0 0.0
    %162 = vmatpush1.msra.mxu0 0.0
    %163 = vmatprep.subr.mxu0 0.0
    %164 = vmatpush1.msra.mxu0 0.0
    %165 = vmatprep.subr.mxu0 0.0
    %166 = vmatpush1.msra.mxu0 0.0
    %167 = vmatprep.subr.mxu0 0.0
    %168 = vmatpush1.msra.mxu0 0.0
    %169 = vmatprep.subr.mxu0 0.0
    %170 = vmatpush1.msra.mxu0 0.0
    %171 = vmatprep.subr.mxu0 0.0
    %172 = vmatpush1.msra.mxu0 0.0
    %173 = vmatprep.mubr.f32.mxu0 0.0
    %174 = vmatmul.mubr.f32.gmra.mrb[0].mxu0 %v85
    %v175 = vpop.f32.mrb[0].mxu0
    %v176 = vadd.f32 %v107, %v175
    %v177 = vpop.f32.mrb[0].mxu0
    %178 = vdwg.mxu0
    %v179 = vmax.f32 %v176, 0.0
    %v180 = vld [vmem:[#allocation5] sm:$0xff]
    %v181 = vld [vmem:[#allocation5 + $0x8] sm:$0xff]
    %v182 = vld [vmem:[#allocation5 + $0x10] sm:$0xff]
    %v183 = vld [vmem:[#allocation5 + $0x18] sm:$0xff]
    %v184 = vld [vmem:[#allocation5 + $0x20] sm:$0xff]
    %v185 = vld [vmem:[#allocation5 + $0x28] sm:$0xff]
    %v186 = vld [vmem:[#allocation5 + $0x30] sm:$0xff]
    %v187 = vld [vmem:[#allocation5 + $0x38] sm:$0xff]
    %v188 = vld [vmem:[#allocation5 + $0x40] sm:$0xff]
    %v189 = vld [vmem:[#allocation5 + $0x48] sm:$0xff]
    %v190 = vld [vmem:[#allocation5 + $0x50] sm:$0xff]
    %v191 = vld [vmem:[#allocation5 + $0x58] sm:$0xff]
    %v192 = vld [vmem:[#allocation5 + $0x60] sm:$0xff]
    %v193 = vld [vmem:[#allocation5 + $0x68] sm:$0xff]
    %v194 = vld [vmem:[#allocation5 + $0x70] sm:$0xff]
    %v195 = vld [vmem:[#allocation5 + $0x78] sm:$0xff]
    %v196 = vld [vmem:[%s6] sm:$0x1]
    %v198 = vlaneseq
    %v199 = vshrl.u32 %v198, 7
    %v200 = vsub.s32 0, %v199
    %v201 = vrot.slane %v196, %v200
    %203 = vmatprep.subr.mxu0 0.0
    %204 = vmatpush1.msra.mxu0 %v180
    %205 = vmatprep.subr.mxu0 0.0
    %206 = vmatpush1.msra.mxu0 %v181
    %207 = vmatprep.subr.mxu0 0.0
    %208 = vmatpush1.msra.mxu0 %v182
    %209 = vmatprep.subr.mxu0 0.0
    %210 = vmatpush1.msra.mxu0 %v183
    %211 = vmatprep.subr.mxu0 0.0
    %212 = vmatpush1.msra.mxu0 %v184
    %213 = vmatprep.subr.mxu0 0.0
    %214 = vmatpush1.msra.mxu0 %v185
    %215 = vmatprep.subr.mxu0 0.0
    %216 = vmatpush1.msra.mxu0 %v186
    %217 = vmatprep.subr.mxu0 0.0
    %218 = vmatpush1.msra.mxu0 %v187
    %219 = vmatprep.subr.mxu0 0.0
    %220 = vmatpush1.msra.mxu0 %v188
    %221 = vmatprep.subr.mxu0 0.0
    %222 = vmatpush1.msra.mxu0 %v189
    %223 = vmatprep.subr.mxu0 0.0
    %224 = vmatpush1.msra.mxu0 %v190
    %225 = vmatprep.subr.mxu0 0.0
    %226 = vmatpush1.msra.mxu0 %v191
    %227 = vmatprep.subr.mxu0 0.0
    %228 = vmatpush1.msra.mxu0 %v192
    %229 = vmatprep.subr.mxu0 0.0
    %230 = vmatpush1.msra.mxu0 %v193
    %231 = vmatprep.subr.mxu0 0.0
    %232 = vmatpush1.msra.mxu0 %v194
    %233 = vmatprep.subr.mxu0 0.0
    %234 = vmatpush1.msra.mxu0 %v195
    %235 = vmatprep.subr.mxu0 0.0
    %236 = vmatpush1.msra.mxu0 0.0
    %237 = vmatprep.subr.mxu0 0.0
    %238 = vmatpush1.msra.mxu0 0.0
    %239 = vmatprep.subr.mxu0 0.0
    %240 = vmatpush1.msra.mxu0 0.0
    %241 = vmatprep.subr.mxu0 0.0
    %242 = vmatpush1.msra.mxu0 0.0
    %243 = vmatprep.subr.mxu0 0.0
    %244 = vmatpush1.msra.mxu0 0.0
    %245 = vmatprep.subr.mxu0 0.0
    %246 = vmatpush1.msra.mxu0 0.0
    %247 = vmatprep.subr.mxu0 0.0
    %248 = vmatpush1.msra.mxu0 0.0
    %249 = vmatprep.subr.mxu0 0.0
    %250 = vmatpush1.msra.mxu0 0.0
    %251 = vmatprep.subr.mxu0 0.0
    %252 = vmatpush1.msra.mxu0 0.0
    %253 = vmatprep.subr.mxu0 0.0
    %254 = vmatpush1.msra.mxu0 0.0
    %255 = vmatprep.subr.mxu0 0.0
    %256 = vmatpush1.msra.mxu0 0.0
    %257 = vmatprep.subr.mxu0 0.0
    %258 = vmatpush1.msra.mxu0 0.0
    %259 = vmatprep.subr.mxu0 0.0
    %260 = vmatpush1.msra.mxu0 0.0
    %261 = vmatprep.subr.mxu0 0.0
    %262 = vmatpush1.msra.mxu0 0.0
    %263 = vmatprep.subr.mxu0 0.0
    %264 = vmatpush1.msra.mxu0 0.0
    %265 = vmatprep.subr.mxu0 0.0
    %266 = vmatpush1.msra.mxu0 0.0
    %267 = vmatprep.mubr.f32.mxu0 0.0
    %268 = vmatmul.mubr.f32.gmra.mrb[0].mxu0 %v179
    %v269 = vpop.f32.mrb[0].mxu0
    %v270 = vadd.f32 %v201, %v269
    %v271 = vpop.f32.mrb[0].mxu0
    %272 = vdwg.mxu0
    %v273 = vlaneseq
    %v274 = vand.u32 %v273, 127
    %vm275 = vcmp.ge.s32.totalorder %v274, 64
    %vm276 = vcmp.lt.s32.totalorder %v274, 66
    %vm277 = vmand %vm275, %vm276
    %v278 = vsel %vm277, %v270, -inf
    %279 = vmax.xlane.f32.xlu0 %v278
    %v280 = vpop.xlane.xlu0 %279
    %v281 = vsub.f32 %v270, %v280
    %v282 = vmul.f32 %v281, 1.442695
    %v283 = vpow.pop %v282
    %v284 = vsel %vm277, %v283, 0.0
    %285 = vadd.xlane.f32.xlu0 %v284
    %v286 = vpop.xlane.xlu0 %285
    %v287 = vrcp.pop %v286
    %v288 = vmul.f32 %v284, %v287
    %vm289 = vcmp.le.s32.totalorder %v274, 2
    %v290 = vsel %vm289, %v270, 0.0
    %v291 = vadd.f32 %v290, %v288
    %292 = vst [vmem:[#allocation7] sm:$0xff] %v291
    // Predicated region
    $region38: #{tpu_custom_call.1} parent=1 // pred_check
      _
    $region39: #{tpu_custom_call.1} parent=1 // pred_check_branch
      %294 = sbr.rel (0) target = $region41
    $region40: #{tpu_custom_call.1} parent=1 // pred_region
      %s296 = ssub.s32 128, 128
      %297 = vsyncadd [#allocation4], %s296
      %s299 = sshll.u32 [#allocation7], 4
      %s300 = int_to_ptr.vmem [resolvable:$true] %s299
      %302 = dma.vmem_to_hbm [thread:$0]  %s300, 128, %s7, [#allocation4]
    $region41: #{tpu_custom_call.1} parent=1 // pred_fallthru
      _
    // Predicated region
    $region42: #{tpu_custom_call.1} parent=1 // pred_check
      _
    $region43: #{tpu_custom_call.1} parent=1 // pred_check_branch
      %304 = sbr.rel (0) target = $region45
    $region44: #{tpu_custom_call.1} parent=1 // pred_region
      %305 = dma.done [#allocation4], 128
    $region45: #{tpu_custom_call.1} parent=1 // pred_fallthru
      _
    %306 = vsyncpa [#allocation3], 1
    %307 = vsyncpa [#allocation6], 1
    %308 = vsyncpa [#allocation4], 1

</llo_original>
